<compile_context>
chip_gen: v7x
topology: tpu7x:2x2x1
jax: 0.10.0
libtpu: 0.0.40
codegen_flags: <defaults>
</compile_context>

<pallas_src>
import functools

import jax
import jax.numpy as jnp
import numpy as np
from jax import lax
from jax.experimental import pallas as pl
from jax.experimental.pallas import tpu as pltpu


def _exact_div_mod(idx_i32, d):
    """Exact floor-div / mod of small non-negative integers via f32.

    Exact for any index < 2**23 (guarded in the wrapper); avoids vector integer
    division.  The +0.5 nudge keeps floor() exact.
    """
    x = idx_i32.astype(jnp.float32)
    q = jnp.floor((x + 0.5) * (1.0 / d))
    r = x - q * d
    return q, r


def _yolo_head_kernel(H, W, P, tile_s, compute_dtype, approx_rcp,
                      x_ref, w_ref, b_ref, asc_ref, o_ref):
    # 1x1 conv == matmul on the MXU: (C_out, C_in) @ (C_in, tile_s), f32 accum.
    v = jnp.dot(w_ref[...].astype(compute_dtype),
                x_ref[...].astype(compute_dtype),
                preferred_element_type=jnp.float32)
    v = v + b_ref[...]                                    # (C_out, tile_s), f32
    c_out = v.shape[0]

    # Per-output-channel selectors, built in-kernel (no DMA): channel c = a*P + k.
    row = lax.broadcasted_iota(jnp.int32, (c_out, 1), 0)
    _, k = _exact_div_mod(row, P)                         # k = c % P, as f32
    is_x = k == 0.0
    is_y = k == 1.0
    is_wh = jnp.logical_or(k == 2.0, k == 3.0)
    xy_scale = jnp.where(is_x, 1.0 / W, jnp.where(is_y, 1.0 / H, 1.0))

    # Per-column grid-cell offsets from the spatial tile index (no DMA).  For the
    # ragged last block the out-of-range columns produce garbage gy/gx/values,
    # but those output columns are dropped by the masked store.
    col = pl.program_id(1) * tile_s + lax.broadcasted_iota(
        jnp.int32, (1, tile_s), 1)
    gy, gx = _exact_div_mod(col, W)                       # row-major flatten of (H, W)

    # Single full-tile exp on the EUP; sigmoid(v) = 1 / (1 + exp(-v)).
    e = jnp.exp(jnp.where(is_wh, v, -v))
    wh_part = asc_ref[...] * e                            # w, h rows (others discarded)
    sig = pl.reciprocal(1.0 + e, approx=approx_rcp)       # sigmoid on non-w/h rows
    offset = jnp.where(is_x, gx, 0.0) + jnp.where(is_y, gy, 0.0)
    sig_part = (sig + offset) * xy_scale                  # x, y, obj, classes
    o_ref[...] = jnp.where(is_wh, wh_part, sig_part).astype(o_ref.dtype)


def yolo_output_pallas(features, conv_w, conv_b, anchors, n_classes,
                       tile_s=1024, compute_dtype=jnp.bfloat16,
                       out_dtype=jnp.float32):
    """features: (B, C_in, H, W) NCHW (f32 or bf16); conv_w: (C_out, C_in, 1, 1);
    conv_b: (C_out,); anchors: (A, 2).
    Returns (B, A, 5+n_classes, H, W) in out_dtype, matching the PyTorch module."""
    B, C_in, H, W = features.shape
    A = anchors.shape[0]
    P = 5 + n_classes
    C_out = P * A
    S = H * W
    assert S < (1 << 23), "in-kernel f32-exact div/mod requires H*W < 2**23"

    x = features.reshape(B, C_in, S)      # free reshape: no pad, no transpose

    # Lane-dense spatial tiling, no padding: ragged last block is masked by Pallas.
    tile_s = max(128, (int(tile_s) // 128) * 128)
    if S <= tile_s:
        # Whole spatial extent in one block (full-dim block also sidesteps the
        # 128-multiple requirement when S itself isn't 128-aligned).
        tile_s = S
    n_tiles = pl.cdiv(S, tile_s)
    # v7x has 2 TensorCores: make sure there are >= 2 parallel grid steps.
    if B * n_tiles < 2 and S > 128:
        tile_s = 128
        n_tiles = pl.cdiv(S, tile_s)
    # TODO(synk): when B == 1 and S <= 128 the grid is a single step; splitting
    # over anchors / C_out instead would feed the second v7x TensorCore.

    w_mat = conv_w.reshape(C_out, C_in).astype(compute_dtype)
    b_col = conv_b.reshape(C_out, 1).astype(jnp.float32)

    # Anchor scale per output channel (1.0 on non-w/h rows; discarded by the select).
    ch = jnp.arange(C_out)
    k = ch % P
    a_idx = ch // P
    anchor_scale = jnp.where(
        k == 2, anchors[a_idx, 0],
        jnp.where(k == 3, anchors[a_idx, 1], 1.0)
    ).reshape(C_out, 1).astype(jnp.float32)

    # Exact reciprocal on the f32 verification path; approx vrcp otherwise.
    approx_rcp = jnp.dtype(compute_dtype) != jnp.dtype(jnp.float32)
    kernel = functools.partial(_yolo_head_kernel, H, W, P, tile_s,
                               compute_dtype, approx_rcp)
    invariant = lambda shape: pl.BlockSpec(shape, lambda b, j: (0, 0))

    # Explicit VMEM budget from the block math (double-buffered activations and
    # outputs + grid-invariant weight/bias/anchor blocks), clamped to 64 MiB so
    # the same sizing is safe on v7x's smaller physical VMEM.
    x_bytes = jnp.dtype(x.dtype).itemsize
    w_bytes = jnp.dtype(compute_dtype).itemsize
    o_bytes = jnp.dtype(out_dtype).itemsize
    per_step = (2 * C_in * tile_s * x_bytes
                + 2 * C_out * tile_s * o_bytes
                + 2 * (C_out * C_in * w_bytes + 2 * C_out * 4))
    vmem_limit = int(min(64 << 20, max(24 << 20, 2 * per_step)))

    cost = pl.CostEstimate(
        flops=int(2 * B * C_out * C_in * S),
        transcendentals=int(B * C_out * S),
        bytes_accessed=int(B * C_in * S * x_bytes
                           + C_out * C_in * w_bytes
                           + B * C_out * S * o_bytes
                           + 2 * C_out * 4),
    )

    out = pl.pallas_call(
        kernel,
        out_shape=jax.ShapeDtypeStruct((B, C_out, S), out_dtype),
        grid_spec=pltpu.PrefetchScalarGridSpec(
            num_scalar_prefetch=0,
            grid=(B, n_tiles),
            in_specs=[
                # TODO(synk): pipeline_mode=pl.Buffered(3) here if profiling shows
                # exposed DMA at small step counts (re-check v7x VMEM budget first).
                pl.BlockSpec((None, C_in, tile_s), lambda b, j: (b, 0, j)),  # activations
                invariant((C_out, C_in)),                                    # weight
                invariant((C_out, 1)),                                       # bias
                invariant((C_out, 1)),                                       # anchor scale
            ],
            out_specs=pl.BlockSpec((None, C_out, tile_s), lambda b, j: (b, 0, j)),
        ),
        compiler_params=pltpu.CompilerParams(
            dimension_semantics=("parallel", "parallel"),
            vmem_limit_bytes=vmem_limit),
        cost_estimate=cost,
    )(x, w_mat, b_col, anchor_scale)

    # (B, C_out, S) -> (B, A, P, H, W): pure reshape, no slice needed.
    return out.reshape(B, A, P, H, W)


def yolo_output_ref(features, conv_w, conv_b, anchors, n_classes):
    """Pure-JAX reference mirroring the PyTorch forward."""
    B, C_in, H, W = features.shape
    A = anchors.shape[0]
    P = 5 + n_classes
    grid = jnp.einsum("bchw,oc->bohw", features, conv_w.reshape(-1, C_in)) \
        + conv_b.reshape(1, -1, 1, 1)
    grid = grid.reshape(B, A, P, H, W)
    gy, gx = jnp.meshgrid(jnp.arange(H, dtype=jnp.float32),
                          jnp.arange(W, dtype=jnp.float32), indexing="ij")
    x = ((gx + jax.nn.sigmoid(grid[:, :, 0])) / W)[:, :, None]
    y = ((gy + jax.nn.sigmoid(grid[:, :, 1])) / H)[:, :, None]
    w = (anchors[:, 0].reshape(1, A, 1, 1) * jnp.exp(grid[:, :, 2]))[:, :, None]
    h = (anchors[:, 1].reshape(1, A, 1, 1) * jnp.exp(grid[:, :, 3]))[:, :, None]
    obj = jax.nn.sigmoid(grid[:, :, 4])[:, :, None]
    classes = jax.nn.sigmoid(grid[:, :, 5:])
    return jnp.concatenate([x, y, w, h, obj, classes], axis=2)


if __name__ == "__main__":
    key = jax.random.PRNGKey(0)
    n_classes = 3
    anchors = jnp.array([[10.0, 13.0], [16.0, 30.0], [33.0, 23.0]],
                        dtype=jnp.float32)
    A = anchors.shape[0]
    C_out = (5 + n_classes) * A

    # Case 1: small aligned map (B=2, 32x8x8) -- f32 path, tight check.
    B, C_in, H, W = 2, 32, 8, 8
    k1, k2, k3 = jax.random.split(key, 3)
    features = jax.random.normal(k1, (B, C_in, H, W), dtype=jnp.float32)
    conv_w = 0.1 * jax.random.normal(k2, (C_out, C_in, 1, 1), dtype=jnp.float32)
    conv_b = 0.1 * jax.random.normal(k3, (C_out,), dtype=jnp.float32)

    ref = yolo_output_ref(features, conv_w, conv_b, anchors, n_classes)

    out_f32 = jax.block_until_ready(
        yolo_output_pallas(features, conv_w, conv_b, anchors, n_classes,
                           compute_dtype=jnp.float32))
    assert out_f32.shape == (B, A, 5 + n_classes, H, W)
    np.testing.assert_allclose(np.asarray(out_f32), np.asarray(ref),
                               rtol=1e-4, atol=1e-4)

    # Default bf16 matmul path (looser tolerance from bf16 inputs + approx rcp).
    out_bf16 = jax.block_until_ready(
        yolo_output_pallas(features, conv_w, conv_b, anchors, n_classes))
    np.testing.assert_allclose(np.asarray(out_bf16), np.asarray(ref),
                               rtol=5e-2, atol=1e-2)

    # bf16 activations + bf16 output: the HBM-traffic-halving configuration.
    out_lp = jax.block_until_ready(
        yolo_output_pallas(features.astype(jnp.bfloat16), conv_w, conv_b,
                           anchors, n_classes, out_dtype=jnp.bfloat16))
    np.testing.assert_allclose(np.asarray(out_lp).astype(np.float32),
                               np.asarray(ref), rtol=5e-2, atol=2e-2)

    # Case 2: realistic non-128-divisible YOLO grid (B=1, 13x13) -> ragged last
    # spatial tile with NO wrapper-side pad/slice, and 2 grid steps (tile_s=128)
    # so both v7x TensorCores get work.
    B2, H2, W2 = 1, 13, 13
    k4 = jax.random.PRNGKey(1)
    features2 = jax.random.normal(k4, (B2, C_in, H2, W2), dtype=jnp.float32)
    ref2 = yolo_output_ref(features2, conv_w, conv_b, anchors, n_classes)
    out2 = jax.block_until_ready(
        yolo_output_pallas(features2, conv_w, conv_b, anchors, n_classes))
    assert out2.shape == (B2, A, 5 + n_classes, H2, W2)
    np.testing.assert_allclose(np.asarray(out2), np.asarray(ref2),
                               rtol=5e-2, atol=1e-2)

    print("KERNEL_OK")
</pallas_src>

<mosaic_0001>
module attributes {stable_mosaic.version = 11 : i64} {
  func.func @_yolo_head_kernel(%arg0: i32, %arg1: i32, %arg2: memref<1x32x64xf32, #tpu.memory_space<vmem>>, %arg3: memref<24x32xf32, #tpu.memory_space<vmem>>, %arg4: memref<24x1xf32, #tpu.memory_space<vmem>>, %arg5: memref<24x1xf32, #tpu.memory_space<vmem>>, %arg6: memref<1x24x64xf32, #tpu.memory_space<vmem>>) attributes {dimension_semantics = [#tpu.dimension_semantics<parallel>, #tpu.dimension_semantics<parallel>], iteration_bounds = array<i64: 2, 1>, scalar_prefetch = 0 : i64, scratch_operands = 0 : i64, tpu.core_type = #tpu.core_type<tc>, window_params = [{transform_indices = @transform_0, window_bounds = array<i64: 1, 32, 64>}, {pipeline_mode = #tpu.pipeline_mode<synchronous>, transform_indices = @transform_1, window_bounds = array<i64: 24, 32>}, {pipeline_mode = #tpu.pipeline_mode<synchronous>, transform_indices = @transform_2, window_bounds = array<i64: 24, 1>}, {pipeline_mode = #tpu.pipeline_mode<synchronous>, transform_indices = @transform_3, window_bounds = array<i64: 24, 1>}, {transform_indices = @transform_4, window_bounds = array<i64: 1, 24, 64>}]} {
    %c0 = arith.constant 0 : index
    %c0_0 = arith.constant 0 : index
    %0 = vector.load %arg3[%c0, %c0_0] : memref<24x32xf32, #tpu.memory_space<vmem>>, vector<24x32xf32>
    %c0_1 = arith.constant 0 : index
    %c0_2 = arith.constant 0 : index
    %c0_3 = arith.constant 0 : index
    %1 = vector.load %arg2[%c0_1, %c0_2, %c0_3] : memref<1x32x64xf32, #tpu.memory_space<vmem>>, vector<1x32x64xf32>
    %2 = vector.shape_cast %1 : vector<1x32x64xf32> to vector<32x64xf32>
    %cst = arith.constant dense<0.000000e+00> : vector<24x64xf32>
    %3 = tpu.matmul %0, %2, %cst {dimension_numbers = #tpu.dot_dimension_numbers<[1], [0], [0], [1], [0, 0, 1, 1], [], []>} : vector<24x32xf32>, vector<32x64xf32>, vector<24x64xf32> -> vector<24x64xf32>
    %c0_4 = arith.constant 0 : index
    %c0_5 = arith.constant 0 : index
    %4 = vector.load %arg4[%c0_4, %c0_5] : memref<24x1xf32, #tpu.memory_space<vmem>>, vector<24x1xf32>
    %5 = vector.broadcast %4 : vector<24x1xf32> to vector<24x64xf32>
    %6 = arith.addf %3, %5 : vector<24x64xf32>
    %7 = tpu.iota {dimensions = array<i32: 0>} : vector<24x1xi32>
    %8 = arith.sitofp %7 : vector<24x1xi32> to vector<24x1xf32>
    %cst_6 = arith.constant 5.000000e-01 : f32
    %9 = vector.broadcast %cst_6 : f32 to vector<24x1xf32>
    %10 = arith.addf %8, %9 : vector<24x1xf32>
    %cst_7 = arith.constant 1.250000e-01 : f32
    %11 = vector.broadcast %cst_7 : f32 to vector<24x1xf32>
    %12 = arith.mulf %10, %11 : vector<24x1xf32>
    %13 = math.floor %12 : vector<24x1xf32>
    %cst_8 = arith.constant 8.000000e+00 : f32
    %14 = vector.broadcast %cst_8 : f32 to vector<24x1xf32>
    %15 = arith.mulf %13, %14 : vector<24x1xf32>
    %16 = arith.subf %8, %15 : vector<24x1xf32>
    %cst_9 = arith.constant 0.000000e+00 : f32
    %17 = vector.broadcast %cst_9 : f32 to vector<24x1xf32>
    %18 = arith.cmpf oeq, %16, %17 : vector<24x1xf32>
    %cst_10 = arith.constant 1.000000e+00 : f32
    %19 = vector.broadcast %cst_10 : f32 to vector<24x1xf32>
    %20 = arith.cmpf oeq, %16, %19 : vector<24x1xf32>
    %cst_11 = arith.constant 2.000000e+00 : f32
    %21 = vector.broadcast %cst_11 : f32 to vector<24x1xf32>
    %22 = arith.cmpf oeq, %16, %21 : vector<24x1xf32>
    %cst_12 = arith.constant 3.000000e+00 : f32
    %23 = vector.broadcast %cst_12 : f32 to vector<24x1xf32>
    %24 = arith.cmpf oeq, %16, %23 : vector<24x1xf32>
    %25 = arith.ori %22, %24 : vector<24x1xi1>
    %cst_13 = arith.constant 1.250000e-01 : f32
    %cst_14 = arith.constant 1.000000e+00 : f32
    %26 = vector.broadcast %cst_13 : f32 to vector<24x1xf32>
    %27 = vector.broadcast %cst_14 : f32 to vector<24x1xf32>
    %28 = arith.select %20, %26, %27 : vector<24x1xi1>, vector<24x1xf32>
    %cst_15 = arith.constant 1.250000e-01 : f32
    %29 = vector.broadcast %cst_15 : f32 to vector<24x1xf32>
    %30 = arith.select %18, %29, %28 : vector<24x1xi1>, vector<24x1xf32>
    %c64_i32 = arith.constant 64 : i32
    %31 = arith.muli %arg1, %c64_i32 : i32
    %32 = tpu.iota {dimensions = array<i32: 1>} : vector<1x64xi32>
    %33 = vector.broadcast %31 : i32 to vector<1x64xi32>
    %34 = arith.addi %33, %32 : vector<1x64xi32>
    %35 = arith.sitofp %34 : vector<1x64xi32> to vector<1x64xf32>
    %cst_16 = arith.constant 5.000000e-01 : f32
    %36 = vector.broadcast %cst_16 : f32 to vector<1x64xf32>
    %37 = arith.addf %35, %36 : vector<1x64xf32>
    %cst_17 = arith.constant 1.250000e-01 : f32
    %38 = vector.broadcast %cst_17 : f32 to vector<1x64xf32>
    %39 = arith.mulf %37, %38 : vector<1x64xf32>
    %40 = math.floor %39 : vector<1x64xf32>
    %cst_18 = arith.constant 8.000000e+00 : f32
    %41 = vector.broadcast %cst_18 : f32 to vector<1x64xf32>
    %42 = arith.mulf %40, %41 : vector<1x64xf32>
    %43 = arith.subf %35, %42 : vector<1x64xf32>
    %cst_19 = arith.constant 0.000000e+00 : f32
    %44 = vector.broadcast %cst_19 : f32 to vector<24x64xf32>
    %45 = arith.subf %44, %6 : vector<24x64xf32>
    %46 = vector.shape_cast %25 : vector<24x1xi1> to vector<24x1xi1>
    %47 = vector.broadcast %46 : vector<24x1xi1> to vector<24x64xi1>
    %48 = arith.select %47, %6, %45 : vector<24x64xi1>, vector<24x64xf32>
    %49 = math.exp %48 : vector<24x64xf32>
    %c0_20 = arith.constant 0 : index
    %c0_21 = arith.constant 0 : index
    %50 = vector.load %arg5[%c0_20, %c0_21] : memref<24x1xf32, #tpu.memory_space<vmem>>, vector<24x1xf32>
    %51 = vector.broadcast %50 : vector<24x1xf32> to vector<24x64xf32>
    %52 = arith.mulf %51, %49 : vector<24x64xf32>
    %cst_22 = arith.constant 1.000000e+00 : f32
    %53 = vector.broadcast %cst_22 : f32 to vector<24x64xf32>
    %54 = arith.addf %53, %49 : vector<24x64xf32>
    %55 = tpu.reciprocal %54 : vector<24x64xf32> -> vector<24x64xf32>
    %cst_23 = arith.constant 0.000000e+00 : f32
    %56 = vector.shape_cast %18 : vector<24x1xi1> to vector<24x1xi1>
    %57 = vector.broadcast %56 : vector<24x1xi1> to vector<24x64xi1>
    %58 = vector.shape_cast %43 : vector<1x64xf32> to vector<1x64xf32>
    %59 = vector.broadcast %58 : vector<1x64xf32> to vector<24x64xf32>
    %60 = vector.broadcast %cst_23 : f32 to vector<24x64xf32>
    %61 = arith.select %57, %59, %60 : vector<24x64xi1>, vector<24x64xf32>
    %cst_24 = arith.constant 0.000000e+00 : f32
    %62 = vector.shape_cast %20 : vector<24x1xi1> to vector<24x1xi1>
    %63 = vector.broadcast %62 : vector<24x1xi1> to vector<24x64xi1>
    %64 = vector.shape_cast %40 : vector<1x64xf32> to vector<1x64xf32>
    %65 = vector.broadcast %64 : vector<1x64xf32> to vector<24x64xf32>
    %66 = vector.broadcast %cst_24 : f32 to vector<24x64xf32>
    %67 = arith.select %63, %65, %66 : vector<24x64xi1>, vector<24x64xf32>
    %68 = arith.addf %61, %67 : vector<24x64xf32>
    %69 = arith.addf %55, %68 : vector<24x64xf32>
    %70 = vector.broadcast %30 : vector<24x1xf32> to vector<24x64xf32>
    %71 = arith.mulf %69, %70 : vector<24x64xf32>
    %72 = vector.shape_cast %25 : vector<24x1xi1> to vector<24x1xi1>
    %73 = vector.broadcast %72 : vector<24x1xi1> to vector<24x64xi1>
    %74 = arith.select %73, %52, %71 : vector<24x64xi1>, vector<24x64xf32>
    %c0_25 = arith.constant 0 : index
    %c0_26 = arith.constant 0 : index
    %c0_27 = arith.constant 0 : index
    %75 = vector.load %arg6[%c0_25, %c0_26, %c0_27] : memref<1x24x64xf32, #tpu.memory_space<vmem>>, vector<1x24x64xf32>
    %76 = vector.shape_cast %75 : vector<1x24x64xf32> to vector<24x64xf32>
    %77 = vector.shape_cast %74 : vector<24x64xf32> to vector<1x24x64xf32>
    tpu.vector_store %arg6[%c0_25, %c0_26, %c0_27], %77 {strides = array<i32>} : memref<1x24x64xf32, #tpu.memory_space<vmem>>, vector<1x24x64xf32>,
    return
  }
  func.func @transform_0(%arg0: i32, %arg1: i32) -> (i32, i32, i32) {
    %c0_i32 = arith.constant 0 : i32
    %c0_i32_0 = arith.constant 0 : i32
    return %arg0, %c0_i32, %arg1 : i32, i32, i32
  }
  func.func @transform_1(%arg0: i32, %arg1: i32) -> (i32, i32) {
    %c0_i32 = arith.constant 0 : i32
    %c0_i32_0 = arith.constant 0 : i32
    %c0_i32_1 = arith.constant 0 : i32
    return %c0_i32, %c0_i32_0 : i32, i32
  }
  func.func @transform_2(%arg0: i32, %arg1: i32) -> (i32, i32) {
    %c0_i32 = arith.constant 0 : i32
    %c0_i32_0 = arith.constant 0 : i32
    %c0_i32_1 = arith.constant 0 : i32
    return %c0_i32, %c0_i32_0 : i32, i32
  }
  func.func @transform_3(%arg0: i32, %arg1: i32) -> (i32, i32) {
    %c0_i32 = arith.constant 0 : i32
    %c0_i32_0 = arith.constant 0 : i32
    %c0_i32_1 = arith.constant 0 : i32
    return %c0_i32, %c0_i32_0 : i32, i32
  }
  func.func @transform_4(%arg0: i32, %arg1: i32) -> (i32, i32, i32) {
    %c0_i32 = arith.constant 0 : i32
    %c0_i32_0 = arith.constant 0 : i32
    return %arg0, %c0_i32, %arg1 : i32, i32, i32
  }
}

</mosaic_0001>

<llo_original>
// kernel: tpu_custom_call.1
$region0: #{tpu_custom_call.1}
  #allocation0 [shape = 'u32[]', space=smem, size = 0x4, offset = 0x4, fixed_abs, tag = 'smem constant byte address 0x4 - core index']
  #allocation1 [shape = 'u32[144,128]{1,0:T(1,128)}', space=vmem, size = 0x12000, scoped, tag = 'internal scratch']
  %s0 = inlined_call_operand.hbm [shape: f32[2,32,64], index: 0, kind: input, shape index: {}]
  %s1 = inlined_call_operand.vmem [shape: f32[24,32], index: 1, kind: input, shape index: {}]
  %s2 = inlined_call_operand.vmem [shape: f32[24,1], index: 2, kind: input, shape index: {}]
  %s3 = inlined_call_operand.vmem [shape: f32[24,1], index: 3, kind: input, shape index: {}]
  %s4 = inlined_call_operand.hbm [shape: f32[2,24,64], index: 4, kind: output, shape index: {}]
  %s5 = sld [smem:[#allocation0]]
  $region53: #{tpu_custom_call.1} parent=0
    _
  %s7 = ssub.s32 1, %s5
  %s8 = scalar_select 0, %s7, %s5
  $region1: #{tpu_custom_call.1} parent=0
    #allocation2 [shape = 'u8[32768]{0}', space=vmem, size = 0x8000, scoped, tag = 'input window, operand 0']
    #allocation3 [shape = 's32[2]{0}', space=sflag, size = 0x8, scoped, tag = 'scoped memory for tpu_custom_call.1']
    #allocation4 [shape = 's32[2]{0}', space=sflag, size = 0x8, scoped, tag = 'scoped memory for tpu_custom_call.1']
    #allocation5 [shape = 'u8[24576]{0}', space=vmem, size = 0x6000, scoped, tag = 'output window, operand 0']
    %9 = vsyncpa [#allocation3], 0
    %s10 = scalar_lea.sflag [#allocation3], 1
    %11 = vsyncpa %s10, 0
    %12 = vsyncpa [#allocation4], 0
    %s13 = scalar_lea.sflag [#allocation4], 1
    %14 = vsyncpa %s13, 0
    loop: start=0, step=1, limit=4
    $region2: #{tpu_custom_call.1} parent=1 // loop_pre_header
      _
    $region3: #{tpu_custom_call.1} parent=1 // loop_header
      %s16 = sphi 0, %s20
      %p17 = scmp.ge.s32.totalorder %s16, 4
      %s23 = sphi 0, %s35
      %s24 = sphi 0, %s31
      %s25 = sphi 0, %s23
      %s26 = sphi 0, %s24
      %s27 = sphi 0, %s25
      %s28 = sphi 0, %s26
      %s40 = sphi 0, %s42
      %s43 = sphi 0, %s40
      %s44 = sphi 0, %s43
      %s60 = sphi 0, %s44
      %s64 = sphi 0, %s64
      %s66 = sphi 0, %s64
      %s67 = sphi 0, %s66
      %s81 = sphi 0, %s67
      %s85 = sphi 0, %s85
      %s87 = sphi 0, %s85
      %s88 = sphi 0, %s87
      %s102 = sphi 0, %s88
      %s106 = sphi 0, %s106
      %s108 = sphi 0, %s106
      %s109 = sphi 0, %s108
      %s123 = sphi 0, %s109
      %s131 = sphi 0, %s133
      %s134 = sphi 0, %s131
      %s135 = sphi 0, %s134
      %s151 = sphi 0, %s135
    $region4: #{tpu_custom_call.1} parent=1 // loop_header_branch
      %19 = sbr.rel (%p17) target = $region8
    $region5: #{tpu_custom_call.1} parent=1 // loop_body
      %s21 = ssub.s32 %s16, 1
      %s22 = ssub.s32 %s16, 2
      %s29 = sadd.s32 1, %s24
      %p30 = scmp.ge.s32.totalorder %s29, 1
      %s31 = scalar_select %p30, 0, %s29
      %s32 = sadd.s32 1, %s23
      %s33 = scalar_select %p30, %s32, %s23
      %p34 = scmp.ge.s32.totalorder %s33, 2
      %s35 = scalar_select %p34, 0, %s33
      %s36 = ssub.s32 %s23, %s35
      %s37 = ssub.s32 %s24, %s31
      %s38 = sor.u32 %s36, %s37
      %p39 = scmp.eq.s32.totalorder %s38, 0
      %s41 = sadd.s32 %s40, 1
      %s42 = scalar_select %p39, %s40, %s41
      %p45 = pneg %p39
      %p46 = scmp.eq.s32.totalorder %s16, 1
      %p47 = por %p45, %p46
      %p48 = scmp.ne.s32.totalorder %s40, %s43
      %p49 = scmp.eq.s32.totalorder %s16, 0
      %p50 = por %p48, %p49
      %p51 = scmp.ne.s32.totalorder %s40, %s43
      %p52 = scmp.eq.s32.totalorder %s21, 1
      %p53 = por %p51, %p52
      %p54 = scmp.ne.s32.totalorder %s43, %s44
      %p55 = scmp.eq.s32.totalorder %s21, 0
      %p56 = por %p54, %p55
      %p57 = scmp.ne.s32.totalorder %s43, %s44
      %p58 = scmp.eq.s32.totalorder %s22, 1
      %p59 = por %p57, %p58
      %p61 = scmp.ne.s32.totalorder %s44, %s60
      %p62 = scmp.eq.s32.totalorder %s22, 0
      %p63 = por %p61, %p62
      %s65 = sadd.s32 %s64, 1
      %p68 = scmp.eq.s32.totalorder %s16, 1
      %p69 = scmp.ne.s32.totalorder %s64, %s66
      %p70 = scmp.eq.s32.totalorder %s16, 0
      %p71 = por %p69, %p70
      %p72 = scmp.ne.s32.totalorder %s64, %s66
      %p73 = scmp.eq.s32.totalorder %s21, 1
      %p74 = por %p72, %p73
      %p75 = scmp.ne.s32.totalorder %s66, %s67
      %p76 = scmp.eq.s32.totalorder %s21, 0
      %p77 = por %p75, %p76
      %p78 = scmp.ne.s32.totalorder %s66, %s67
      %p79 = scmp.eq.s32.totalorder %s22, 1
      %p80 = por %p78, %p79
      %p82 = scmp.ne.s32.totalorder %s67, %s81
      %p83 = scmp.eq.s32.totalorder %s22, 0
      %p84 = por %p82, %p83
      %s86 = sadd.s32 %s85, 1
      %p89 = scmp.eq.s32.totalorder %s16, 1
      %p90 = scmp.ne.s32.totalorder %s85, %s87
      %p91 = scmp.eq.s32.totalorder %s16, 0
      %p92 = por %p90, %p91
      %p93 = scmp.ne.s32.totalorder %s85, %s87
      %p94 = scmp.eq.s32.totalorder %s21, 1
      %p95 = por %p93, %p94
      %p96 = scmp.ne.s32.totalorder %s87, %s88
      %p97 = scmp.eq.s32.totalorder %s21, 0
      %p98 = por %p96, %p97
      %p99 = scmp.ne.s32.totalorder %s87, %s88
      %p100 = scmp.eq.s32.totalorder %s22, 1
      %p101 = por %p99, %p100
      %p103 = scmp.ne.s32.totalorder %s88, %s102
      %p104 = scmp.eq.s32.totalorder %s22, 0
      %p105 = por %p103, %p104
      %s107 = sadd.s32 %s106, 1
      %p110 = scmp.eq.s32.totalorder %s16, 1
      %p111 = scmp.ne.s32.totalorder %s106, %s108
      %p112 = scmp.eq.s32.totalorder %s16, 0
      %p113 = por %p111, %p112
      %p114 = scmp.ne.s32.totalorder %s106, %s108
      %p115 = scmp.eq.s32.totalorder %s21, 1
      %p116 = por %p114, %p115
      %p117 = scmp.ne.s32.totalorder %s108, %s109
      %p118 = scmp.eq.s32.totalorder %s21, 0
      %p119 = por %p117, %p118
      %p120 = scmp.ne.s32.totalorder %s108, %s109
      %p121 = scmp.eq.s32.totalorder %s22, 1
      %p122 = por %p120, %p121
      %p124 = scmp.ne.s32.totalorder %s109, %s123
      %p125 = scmp.eq.s32.totalorder %s22, 0
      %p126 = por %p124, %p125
      %s127 = ssub.s32 %s23, %s35
      %s128 = ssub.s32 %s24, %s31
      %s129 = sor.u32 %s127, %s128
      %p130 = scmp.eq.s32.totalorder %s129, 0
      %s132 = sadd.s32 %s131, 1
      %s133 = scalar_select %p130, %s131, %s132
      %p136 = pneg %p130
      %p137 = scmp.eq.s32.totalorder %s16, 1
      %p138 = por %p136, %p137
      %p139 = scmp.ne.s32.totalorder %s131, %s134
      %p140 = scmp.eq.s32.totalorder %s16, 0
      %p141 = por %p139, %p140
      %p142 = scmp.ne.s32.totalorder %s131, %s134
      %p143 = scmp.eq.s32.totalorder %s21, 1
      %p144 = por %p142, %p143
      %p145 = scmp.ne.s32.totalorder %s134, %s135
      %p146 = scmp.eq.s32.totalorder %s21, 0
      %p147 = por %p145, %p146
      %p148 = scmp.ne.s32.totalorder %s134, %s135
      %p149 = scmp.eq.s32.totalorder %s22, 1
      %p150 = por %p148, %p149
      %p152 = scmp.ne.s32.totalorder %s135, %s151
      %p153 = scmp.eq.s32.totalorder %s22, 0
      %p154 = por %p152, %p153
      %p155 = scmp.le.s32.totalorder 1, %s16
      %p156 = scmp.lt.s32.totalorder %s16, 3
      %p157 = pnand %p155, %p156
      %p158 = pneg %p157
      // Predicated region
      $region9: #{tpu_custom_call.1} parent=5 // pred_check
        _
      $region10: #{tpu_custom_call.1} parent=5 // pred_check_branch
        %160 = sbr.rel (%p157) target = $region12
      $region11: #{tpu_custom_call.1} parent=5 // pred_region
        %s161 = ssub.s32 %s16, 1
        // Predicated region
        $region13: #{tpu_custom_call.1} parent=11 // pred_check
          %p162 = pneg %p77
        $region14: #{tpu_custom_call.1} parent=11 // pred_check_branch
          %164 = sbr.rel (%p162) target = $region16
        $region15: #{tpu_custom_call.1} parent=11 // pred_region
          _
        $region16: #{tpu_custom_call.1} parent=11 // pred_fallthru
          _
        // Predicated region
        $region17: #{tpu_custom_call.1} parent=11 // pred_check
          %p165 = pneg %p98
        $region18: #{tpu_custom_call.1} parent=11 // pred_check_branch
          %167 = sbr.rel (%p165) target = $region20
        $region19: #{tpu_custom_call.1} parent=11 // pred_region
          _
        $region20: #{tpu_custom_call.1} parent=11 // pred_fallthru
          _
        // Predicated region
        $region21: #{tpu_custom_call.1} parent=11 // pred_check
          %p168 = pneg %p119
        $region22: #{tpu_custom_call.1} parent=11 // pred_check_branch
          %170 = sbr.rel (%p168) target = $region24
        $region23: #{tpu_custom_call.1} parent=11 // pred_region
          _
        $region24: #{tpu_custom_call.1} parent=11 // pred_fallthru
          _
      $region12: #{tpu_custom_call.1} parent=5 // pred_fallthru
        _
      %p171 = scmp.lt.s32.totalorder %s16, 2
      // Predicated region
      $region25: #{tpu_custom_call.1} parent=5 // pred_check
        %p172 = pneg %p171
      $region26: #{tpu_custom_call.1} parent=5 // pred_check_branch
        %174 = sbr.rel (%p172) target = $region28
      $region27: #{tpu_custom_call.1} parent=5 // pred_region
        // Predicated region
        $region29: #{tpu_custom_call.1} parent=27 // pred_check
          %p175 = pneg %p50
        $region30: #{tpu_custom_call.1} parent=27 // pred_check_branch
          %177 = sbr.rel (%p175) target = $region32
        $region31: #{tpu_custom_call.1} parent=27 // pred_region
          %s178 = sand.u32 %s40, 1
          %s179 = scalar_lea.sflag [#allocation3], %s178
          %s180 = sand.u32 %s40, 1
          %s181 = smul.addr %s180, 32
          %s182 = scalar_lea.vmem [#allocation2], %s181
          %s184 = ssub.s32 512, 512
          %185 = vsyncadd %s179, %s184
          %s186 = smul.addr %s23, 4
          %s187 = sadd.s32 %s24, %s186
          %s188 = smul.addr %s187, 128
          %s189 = scalar_lea.hbm %s0, %s188
          %s190 = sshll.u32 %s182, 4
          %s191 = int_to_ptr.vmem [resolvable:$true] %s190
          %196 = dma.hbm_to_vmem [thread:$0]  %s189, 512, %s191, %s179, 128, 128, 8
        $region32: #{tpu_custom_call.1} parent=27 // pred_fallthru
          _
      $region28: #{tpu_custom_call.1} parent=5 // pred_fallthru
        _
      %p197 = scmp.le.s32.totalorder 1, %s16
      %p198 = scmp.lt.s32.totalorder %s16, 3
      %p199 = pnand %p197, %p198
      %p200 = pneg %p199
      // Predicated region
      $region33: #{tpu_custom_call.1} parent=5 // pred_check
        _
      $region34: #{tpu_custom_call.1} parent=5 // pred_check_branch
        %202 = sbr.rel (%p199) target = $region36
      $region35: #{tpu_custom_call.1} parent=5 // pred_region
        %s203 = ssub.s32 %s16, 1
        %s204 = sand.u32 %s43, 1
        %s205 = scalar_lea.sflag [#allocation3], %s204
        %s206 = sand.u32 %s43, 1
        %s207 = smul.addr %s206, 32
        %s208 = scalar_lea.vmem [#allocation2], %s207
        // Predicated region
        $region37: #{tpu_custom_call.1} parent=35 // pred_check
          %p209 = pneg %p56
        $region38: #{tpu_custom_call.1} parent=35 // pred_check_branch
          %211 = sbr.rel (%p209) target = $region40
        $region39: #{tpu_custom_call.1} parent=35 // pred_region
          %212 = dma.done %s205, 512
        $region40: #{tpu_custom_call.1} parent=35 // pred_fallthru
          _
        %s213 = sand.u32 %s43, 1
        %s214 = scalar_lea.sflag [#allocation3], %s213
        %s215 = sand.u32 %s43, 1
        %s216 = smul.addr %s215, 32
        %s217 = scalar_lea.vmem [#allocation2], %s216
        %p218 = pneg %p56
        %p219 = pneg %p53
        %p220 = pneg %p77
        %p221 = pneg %p74
        %p222 = pneg %p98
        %p223 = pneg %p95
        %p224 = pneg %p119
        %p225 = pneg %p116
        %p226 = pneg %p147
        %p227 = pneg %p144
        %s228 = sand.u32 %s134, 1
        %s229 = scalar_lea.sflag [#allocation4], %s228
        %s230 = sand.u32 %s134, 1
        %s231 = smul.addr %s230, 24
        %s232 = scalar_lea.vmem [#allocation5], %s231
        %v233 = vld [vmem:[%s1] sm:$0xff]
        %v234 = vld [vmem:[%s1 + $0x8] sm:$0xff]
        %v235 = vld [vmem:[%s1 + $0x10] sm:$0xff]
        %v236 = vld [vmem:[%s208] sm:$0xff]
        %v237 = vld [vmem:[%s208 + $0x8] sm:$0xff]
        %v238 = vld [vmem:[%s208 + $0x10] sm:$0xff]
        %v239 = vld [vmem:[%s208 + $0x18] sm:$0xff]
        %v240 = vld [vmem:[%s2] sm:$0xff]
        %v241 = vld [vmem:[%s2 + $0x8] sm:$0xff]
        %v242 = vld [vmem:[%s2 + $0x10] sm:$0xff]
        %244 = vset.pattern.permute.xlu0 0
        %245 = vperm.xlu0 %244, %v240
        %v246 = vpop.permute.xlu0 %245
        %249 = vset.pattern.permute.xlu0 0
        %250 = vperm.xlu0 %249, %v241
        %v251 = vpop.permute.xlu0 %250
        %254 = vset.pattern.permute.xlu0 0
        %255 = vperm.xlu0 %254, %v242
        %v256 = vpop.permute.xlu0 %255
        %vm258 = vcmask 261120
        %v260 = vsel %vm258, %v233, 0
        %v263 = vsel %vm258, %v234, 0
        %v266 = vsel %vm258, %v235, 0
        %268 = vmatprep.subr.mxu0 0.0
        %269 = vmatpush1.msra.mxu0 %v236
        %270 = vmatprep.subr.mxu0 0.0
        %271 = vmatpush1.msra.mxu0 %v237
        %272 = vmatprep.subr.mxu0 0.0
        %273 = vmatpush1.msra.mxu0 %v238
        %274 = vmatprep.subr.mxu0 0.0
        %275 = vmatpush1.msra.mxu0 %v239
        %276 = vmatprep.subr.mxu0 0.0
        %277 = vmatpush1.msra.mxu0 0.0
        %278 = vmatprep.subr.mxu0 0.0
        %279 = vmatpush1.msra.mxu0 0.0
        %280 = vmatprep.subr.mxu0 0.0
        %281 = vmatpush1.msra.mxu0 0.0
        %282 = vmatprep.subr.mxu0 0.0
        %283 = vmatpush1.msra.mxu0 0.0
        %284 = vmatprep.subr.mxu0 0.0
        %285 = vmatpush1.msra.mxu0 0.0
        %286 = vmatprep.subr.mxu0 0.0
        %287 = vmatpush1.msra.mxu0 0.0
        %288 = vmatprep.subr.mxu0 0.0
        %289 = vmatpush1.msra.mxu0 0.0
        %290 = vmatprep.subr.mxu0 0.0
        %291 = vmatpush1.msra.mxu0 0.0
        %292 = vmatprep.subr.mxu0 0.0
        %293 = vmatpush1.msra.mxu0 0.0
        %294 = vmatprep.subr.mxu0 0.0
        %295 = vmatpush1.msra.mxu0 0.0
        %296 = vmatprep.subr.mxu0 0.0
        %297 = vmatpush1.msra.mxu0 0.0
        %298 = vmatprep.subr.mxu0 0.0
        %299 = vmatpush1.msra.mxu0 0.0
        %300 = vmatprep.subr.mxu0 0.0
        %301 = vmatpush1.msra.mxu0 0.0
        %302 = vmatprep.subr.mxu0 0.0
        %303 = vmatpush1.msra.mxu0 0.0
        %304 = vmatprep.subr.mxu0 0.0
        %305 = vmatpush1.msra.mxu0 0.0
        %306 = vmatprep.subr.mxu0 0.0
        %307 = vmatpush1.msra.mxu0 0.0
        %308 = vmatprep.subr.mxu0 0.0
        %309 = vmatpush1.msra.mxu0 0.0
        %310 = vmatprep.subr.mxu0 0.0
        %311 = vmatpush1.msra.mxu0 0.0
        %312 = vmatprep.subr.mxu0 0.0
        %313 = vmatpush1.msra.mxu0 0.0
        %314 = vmatprep.subr.mxu0 0.0
        %315 = vmatpush1.msra.mxu0 0.0
        %316 = vmatprep.subr.mxu0 0.0
        %317 = vmatpush1.msra.mxu0 0.0
        %318 = vmatprep.subr.mxu0 0.0
        %319 = vmatpush1.msra.mxu0 0.0
        %320 = vmatprep.subr.mxu0 0.0
        %321 = vmatpush1.msra.mxu0 0.0
        %322 = vmatprep.subr.mxu0 0.0
        %323 = vmatpush1.msra.mxu0 0.0
        %324 = vmatprep.subr.mxu0 0.0
        %325 = vmatpush1.msra.mxu0 0.0
        %326 = vmatprep.subr.mxu0 0.0
        %327 = vmatpush1.msra.mxu0 0.0
        %328 = vmatprep.subr.mxu0 0.0
        %329 = vmatpush1.msra.mxu0 0.0
        %330 = vmatprep.subr.mxu0 0.0
        %331 = vmatpush1.msra.mxu0 0.0
        %332 = vmatprep.mubr.f32.mxu0 0.0
        %333 = vmatmul.mubr.f32.gmra.mrb[0].mxu0 %v260
        %v334 = vpop.f32.mrb[0].mxu0
        %v335 = vadd.f32 %v246, %v334
        %v336 = vpop.f32.mrb[0].mxu0
        %337 = vmatprep.mubr.f32.mxu0 0.0
        %338 = vmatmul.mubr.f32.gmra.mrb[0].mxu0 %v263
        %v339 = vpop.f32.mrb[0].mxu0
        %v340 = vadd.f32 %v251, %v339
        %v341 = vpop.f32.mrb[0].mxu0
        %342 = vmatprep.mubr.f32.mxu0 0.0
        %343 = vmatmul.mubr.f32.gmra.mrb[0].mxu0 %v266
        %v344 = vpop.f32.mrb[0].mxu0
        %v345 = vadd.f32 %v256, %v344
        %v346 = vpop.f32.mrb[0].mxu0
        %347 = vdwg.mxu0
        %v348 = vlaneseq
        %v349 = vshrl.u32 %v348, 7
        %v350 = vadd.s32 %v349, 8
        %v351 = vadd.s32 %v349, 16
        %v352 = vcvt.s32.f32 %v349
        %v353 = vcvt.s32.f32 %v350
        %v354 = vcvt.s32.f32 %v351
        %v355 = vadd.f32 %v352, 0.5
        %v356 = vadd.f32 %v353, 0.5
        %v357 = vadd.f32 %v354, 0.5
        %v358 = vmul.f32 %v355, 0.125
        %v359 = vmul.f32 %v356, 0.125
        %v360 = vmul.f32 %v357, 0.125
        %v361 = vfloor.f32 %v358
        %v362 = vfloor.f32 %v359
        %v363 = vfloor.f32 %v360
        %v364 = vmul.f32 %v361, 8.0
        %v365 = vmul.f32 %v362, 8.0
        %v366 = vmul.f32 %v363, 8.0
        %v367 = vsub.f32 %v352, %v364
        %v368 = vsub.f32 %v353, %v365
        %v369 = vsub.f32 %v354, %v366
        %vm370 = vcmp.eq.f32.partialorder %v367, 0.0
        %vm371 = vcmp.eq.f32.partialorder %v368, 0.0
        %vm372 = vcmp.eq.f32.partialorder %v369, 0.0
        %vm373 = vcmp.eq.f32.partialorder %v367, 1.0
        %vm374 = vcmp.eq.f32.partialorder %v368, 1.0
        %vm375 = vcmp.eq.f32.partialorder %v369, 1.0
        %vm376 = vcmp.eq.f32.partialorder %v367, 2.0
        %vm377 = vcmp.eq.f32.partialorder %v368, 2.0
        %vm378 = vcmp.eq.f32.partialorder %v369, 2.0
        %vm379 = vcmp.eq.f32.partialorder %v367, 3.0
        %vm380 = vcmp.eq.f32.partialorder %v368, 3.0
        %vm381 = vcmp.eq.f32.partialorder %v369, 3.0
        %vm382 = vmor %vm376, %vm379
        %vm383 = vmor %vm377, %vm380
        %vm384 = vmor %vm378, %vm381
        %v385 = vsel %vm373, 0.125, 1.0
        %v386 = vsel %vm374, 0.125, 1.0
        %v387 = vsel %vm375, 0.125, 1.0
        %v388 = vsel %vm370, 0.125, %v385
        %v389 = vsel %vm371, 0.125, %v386
        %v390 = vsel %vm372, 0.125, %v387
        %s391 = smul.u32 %s26, 64
        %v392 = vlaneseq
        %v393 = vand.u32 %v392, 127
        %v394 = vstv %s391
        %v395 = vadd.s32 %v394, %v393
        %v396 = vcvt.s32.f32 %v395
        %v397 = vadd.f32 %v396, 0.5
        %v398 = vmul.f32 %v397, 0.125
        %v399 = vfloor.f32 %v398
        %v400 = vmul.f32 %v399, 8.0
        %v401 = vsub.f32 %v396, %v400
        %v402 = vsub.f32 0.0, %v335
        %v403 = vsub.f32 0.0, %v340
        %v404 = vsub.f32 0.0, %v345
        %v405 = vsel %vm382, 1, 0
        %v406 = vsel %vm383, 1, 0
        %v407 = vsel %vm384, 1, 0
        %vm408 = vcmp.eq.s32.totalorder %v405, 1
        %vm409 = vcmp.eq.s32.totalorder %v406, 1
        %vm410 = vcmp.eq.s32.totalorder %v407, 1
        %v411 = vsel %vm408, %v335, %v402
        %v412 = vsel %vm409, %v340, %v403
        %v413 = vsel %vm410, %v345, %v404
        %v414 = vmul.f32 %v411, 1.442695
        %v415 = vpow.pop %v414
        %v416 = vmul.f32 %v412, 1.442695
        %v417 = vpow.pop %v416
        %v418 = vmul.f32 %v413, 1.442695
        %v419 = vpow.pop %v418
        %v420 = vld [vmem:[%s3] sm:$0xff]
        %v421 = vld [vmem:[%s3 + $0x8] sm:$0xff]
        %v422 = vld [vmem:[%s3 + $0x10] sm:$0xff]
        %424 = vset.pattern.permute.xlu0 0
        %425 = vperm.xlu0 %424, %v420
        %v426 = vpop.permute.xlu0 %425
        %429 = vset.pattern.permute.xlu0 0
        %430 = vperm.xlu0 %429, %v421
        %v431 = vpop.permute.xlu0 %430
        %434 = vset.pattern.permute.xlu0 0
        %435 = vperm.xlu0 %434, %v422
        %v436 = vpop.permute.xlu0 %435
        %v438 = vmul.f32 %v426, %v415
        %v439 = vmul.f32 %v431, %v417
        %v440 = vmul.f32 %v436, %v419
        %v441 = vadd.f32 %v415, 1.0
        %v442 = vadd.f32 %v417, 1.0
        %v443 = vadd.f32 %v419, 1.0
        %v444 = vrcp.pop %v441
        %v445 = vrcp.pop %v442
        %v446 = vrcp.pop %v443
        %v447 = vsel %vm370, 1, 0
        %v448 = vsel %vm371, 1, 0
        %v449 = vsel %vm372, 1, 0
        %vm450 = vcmp.eq.s32.totalorder %v447, 1
        %vm451 = vcmp.eq.s32.totalorder %v448, 1
        %vm452 = vcmp.eq.s32.totalorder %v449, 1
        %v453 = vsel %vm450, %v401, 0.0
        %v454 = vsel %vm451, %v401, 0.0
        %v455 = vsel %vm452, %v401, 0.0
        %v456 = vsel %vm373, 1, 0
        %v457 = vsel %vm374, 1, 0
        %v458 = vsel %vm375, 1, 0
        %vm459 = vcmp.eq.s32.totalorder %v456, 1
        %vm460 = vcmp.eq.s32.totalorder %v457, 1
        %vm461 = vcmp.eq.s32.totalorder %v458, 1
        %v462 = vsel %vm459, %v399, 0.0
        %v463 = vsel %vm460, %v399, 0.0
        %v464 = vsel %vm461, %v399, 0.0
        %v465 = vadd.f32 %v453, %v462
        %v466 = vadd.f32 %v454, %v463
        %v467 = vadd.f32 %v455, %v464
        %v468 = vadd.f32 %v444, %v465
        %v469 = vadd.f32 %v445, %v466
        %v470 = vadd.f32 %v446, %v467
        %v471 = vmul.f32 %v468, %v388
        %v472 = vmul.f32 %v469, %v389
        %v473 = vmul.f32 %v470, %v390
        %v474 = vsel %vm408, %v438, %v471
        %v475 = vsel %vm409, %v439, %v472
        %v476 = vsel %vm410, %v440, %v473
        %vm477 = vcmask 523264
        %478 = vst.msk [vmem:[%s232] sm:$0xff] %vm477, %v474
        %479 = vst.msk [vmem:[%s232 + $0x8] sm:$0xff] %vm477, %v475
        %480 = vst.msk [vmem:[%s232 + $0x10] sm:$0xff] %vm477, %v476
        %s481 = sand.u32 %s134, 1
        %s482 = scalar_lea.sflag [#allocation4], %s481
        %s483 = sand.u32 %s134, 1
        %s484 = smul.addr %s483, 24
        %s485 = scalar_lea.vmem [#allocation5], %s484
        // Predicated region
        $region41: #{tpu_custom_call.1} parent=35 // pred_check
          %p486 = pneg %p144
        $region42: #{tpu_custom_call.1} parent=35 // pred_check_branch
          %488 = sbr.rel (%p486) target = $region44
        $region43: #{tpu_custom_call.1} parent=35 // pred_region
          %s490 = ssub.s32 384, 384
          %491 = vsyncadd %s482, %s490
          %s492 = smul.addr %s25, 3
          %s493 = sadd.s32 %s26, %s492
          %s494 = smul.addr %s493, 128
          %s495 = scalar_lea.hbm %s4, %s494
          %s496 = sshll.u32 %s485, 4
          %s497 = int_to_ptr.vmem [resolvable:$true] %s496
          %502 = dma.vmem_to_hbm [thread:$0]  %s497, 384, %s495, %s482, 128, 128, 8
        $region44: #{tpu_custom_call.1} parent=35 // pred_fallthru
          _
      $region36: #{tpu_custom_call.1} parent=5 // pred_fallthru
        _
      %p503 = scmp.le.s32.totalorder 2, %s16
      // Predicated region
      $region45: #{tpu_custom_call.1} parent=5 // pred_check
        %p504 = pneg %p503
      $region46: #{tpu_custom_call.1} parent=5 // pred_check_branch
        %506 = sbr.rel (%p504) target = $region48
      $region47: #{tpu_custom_call.1} parent=5 // pred_region
        %s507 = ssub.s32 %s16, 2
        // Predicated region
        $region49: #{tpu_custom_call.1} parent=47 // pred_check
          %p508 = pneg %p150
        $region50: #{tpu_custom_call.1} parent=47 // pred_check_branch
          %510 = sbr.rel (%p508) target = $region52
        $region51: #{tpu_custom_call.1} parent=47 // pred_region
          %s511 = sand.u32 %s135, 1
          %s512 = scalar_lea.sflag [#allocation4], %s511
          %s513 = sand.u32 %s135, 1
          %s514 = smul.addr %s513, 24
          %s515 = scalar_lea.vmem [#allocation5], %s514
          %516 = dma.done %s512, 384
        $region52: #{tpu_custom_call.1} parent=47 // pred_fallthru
          _
      $region48: #{tpu_custom_call.1} parent=5 // pred_fallthru
        _
    $region6: #{tpu_custom_call.1} parent=1 // loop_footer
      %s20 = sadd.s32 1, %s16
    $region7: #{tpu_custom_call.1} parent=1 // loop_footer_branch
      %15 = sbr.rel target = $region3
    $region8: #{tpu_custom_call.1} parent=1 // loop_exit
      _
    %517 = vsyncpa [#allocation3], 1
    %s518 = scalar_lea.sflag [#allocation3], 1
    %519 = vsyncpa %s518, 1
    %520 = vsyncpa [#allocation4], 1
    %s521 = scalar_lea.sflag [#allocation4], 1
    %522 = vsyncpa %s521, 1

</llo_original>
